<compile_context>
chip_gen: v5e
topology: v5e:2x2
jax: 0.10.0
libtpu: 0.0.40
codegen_flags: <defaults>
</compile_context>

<pallas_src>
import functools

import jax
import jax.numpy as jnp
from jax import lax
from jax.experimental import pallas as pl
from jax.experimental.pallas import tpu as pltpu


def _round_up(x, m):
    return (x + m - 1) // m * m


def _pick_tile(dim_pad, cap):
    """Largest multiple-of-128 divisor of dim_pad that is <= cap."""
    t = max(128, (min(dim_pad, cap) // 128) * 128)
    while dim_pad % t != 0:
        t -= 128
    return t


def fc_block_kernel(x_ref, w_ref, gamma_ref, beta_ref, u_ref, o_ref, acc_ref,
                    *, keep_prob, eps):
    k = pl.program_id(1)
    nk = pl.num_programs(1)

    @pl.when(k == 0)
    def _():
        acc_ref[...] = jnp.zeros_like(acc_ref)

    # Partial Linear: x (N, TK) contracted with W (TN, TK) along the TK axis
    # (PyTorch weight layout consumed directly by the MXU).
    acc_ref[...] += lax.dot_general(
        x_ref[...], w_ref[...],
        dimension_numbers=(((1,), (1,)), ((), ())),
        preferred_element_type=jnp.float32)

    @pl.when(k == nk - 1)
    def _():
        y = acc_ref[...]                                     # (N, TN) f32

        # BatchNorm1d (training mode, biased batch stats); affine folded into
        # a single multiply-add.  Linear bias omitted: it is exactly cancelled
        # by the batch-mean subtraction.
        mean = jnp.mean(y, axis=0, keepdims=True)            # (1, TN)
        var = jnp.mean(y * y, axis=0, keepdims=True) - mean * mean
        scale = gamma_ref[...] * lax.rsqrt(var + eps)
        shift = beta_ref[...] - mean * scale
        y = y * scale + shift

        # ReLU
        y = jnp.maximum(y, 0.0)

        # Dropout (training mode, inverted scaling); uniforms streamed in.
        if keep_prob <= 0.0:
            y = jnp.zeros_like(y)
        elif keep_prob < 1.0:
            y = jnp.where(u_ref[...] < keep_prob, y * (1.0 / keep_prob), 0.0)

        o_ref[...] = y.astype(o_ref.dtype)


def fc_block(x, w, b, gamma, beta, dropout_key, *, p_drop=0.5, eps=1e-5,
             max_tile=512):
    """x: (N, in_dim) f32; w: (out_dim, in_dim) f32 (PyTorch layout);
    b, gamma, beta: (out_dim,) f32; dropout_key: jax PRNG key.

    The Linear bias `b` is accepted for interface parity but is mathematically
    a no-op under train-mode BatchNorm (batch-mean subtraction cancels it)."""
    N, in_dim = x.shape
    out_dim, in_dim_w = w.shape
    assert in_dim_w == in_dim
    del b  # exactly cancelled by BN's batch-mean subtraction

    K_pad = _round_up(in_dim, 128)
    O_pad = _round_up(out_dim, 128)
    tk = _pick_tile(K_pad, max_tile)
    tn = _pick_tile(O_pad, max_tile)

    keep_prob = 1.0 - float(p_drop)

    # Zero-pad to lane-dense, MXU-aligned shapes (pad features are inert and
    # sliced off below).
    x_p = jnp.pad(x.astype(jnp.float32), ((0, 0), (0, K_pad - in_dim)))
    w_p = jnp.pad(w.astype(jnp.float32),
                  ((0, O_pad - out_dim), (0, K_pad - in_dim)))
    g_p = jnp.pad(gamma.astype(jnp.float32), (0, O_pad - out_dim),
                  constant_values=1.0).reshape(1, O_pad)
    be_p = jnp.pad(beta.astype(jnp.float32),
                   (0, O_pad - out_dim)).reshape(1, O_pad)

    # Dropout uniforms: generated once per call, deterministic in dropout_key,
    # real columns identical to jax.random.uniform(key, (N, out_dim)).
    u = jax.random.uniform(dropout_key, (N, out_dim), jnp.float32)
    u_p = jnp.pad(u, ((0, 0), (0, O_pad - out_dim)), constant_values=1.0)

    kernel = functools.partial(fc_block_kernel, keep_prob=keep_prob, eps=eps)

    grid = (O_pad // tn, K_pad // tk)      # (feature tiles, reduction tiles)

    out = pl.pallas_call(
        kernel,
        out_shape=jax.ShapeDtypeStruct((N, O_pad), jnp.float32),
        grid=grid,
        in_specs=[
            pl.BlockSpec((N, tk), lambda j, k: (0, k)),      # x
            pl.BlockSpec((tn, tk), lambda j, k: (j, k)),     # W (torch layout)
            pl.BlockSpec((1, tn), lambda j, k: (0, j)),      # gamma
            pl.BlockSpec((1, tn), lambda j, k: (0, j)),      # beta
            pl.BlockSpec((N, tn), lambda j, k: (0, j)),      # dropout uniforms
        ],
        out_specs=pl.BlockSpec((N, tn), lambda j, k: (0, j)),
        scratch_shapes=[pltpu.VMEM((N, tn), jnp.float32)],
        compiler_params=pltpu.CompilerParams(
            dimension_semantics=("parallel", "arbitrary")),
    )(x_p, w_p, g_p, be_p, u_p)

    return out[:, :out_dim]


def fc_block_reference(x, w, b, gamma, beta, u, p_drop, eps):
    """Pure-JAX reference matching PyTorch Linear -> BN1d(train) -> ReLU -> Dropout."""
    y = x @ w.T + b
    mean = jnp.mean(y, axis=0, keepdims=True)
    var = jnp.mean((y - mean) ** 2, axis=0, keepdims=True)
    y = (y - mean) * lax.rsqrt(var + eps) * gamma + beta
    y = jnp.maximum(y, 0.0)
    keep = 1.0 - p_drop
    if keep <= 0.0:
        return jnp.zeros_like(y)
    if keep < 1.0:
        y = jnp.where(u < keep, y / keep, 0.0)
    return y


if __name__ == "__main__":
    # Small shapes; feature dims chosen non-multiples of 128 to exercise the
    # padding path, max_tile=128 to exercise a multi-step (3 x 2) grid.
    N, IN_DIM, OUT_DIM = 16, 192, 320
    P_DROP = 0.5
    EPS = 1e-5

    key = jax.random.PRNGKey(0)
    kx, kw, kb, kd = jax.random.split(key, 4)

    x = jax.random.normal(kx, (N, IN_DIM), dtype=jnp.float32)

    # PyTorch-style Linear init bounds; BN gamma=1, beta=0.
    bound = 1.0 / (IN_DIM ** 0.5)
    w = jax.random.uniform(kw, (OUT_DIM, IN_DIM), jnp.float32, -bound, bound)
    b = jax.random.uniform(kb, (OUT_DIM,), jnp.float32, -bound, bound)
    gamma = jnp.ones((OUT_DIM,), jnp.float32)
    beta = jnp.zeros((OUT_DIM,), jnp.float32)

    out = fc_block(x, w, b, gamma, beta, kd, p_drop=P_DROP, eps=EPS,
                   max_tile=128)
    out = jax.block_until_ready(out)

    assert out.shape == (N, OUT_DIM) and out.dtype == jnp.float32

    # Correctness check against a pure-JAX reference using the same dropout
    # uniforms (regenerated from the same key/shape as inside the wrapper).
    u = jax.random.uniform(kd, (N, OUT_DIM), jnp.float32)
    ref = fc_block_reference(x, w, b, gamma, beta, u, P_DROP, EPS)
    assert jnp.allclose(out, ref, atol=1e-3, rtol=1e-3), \
        float(jnp.max(jnp.abs(out - ref)))

    print("KERNEL_OK")
</pallas_src>

<mosaic_0001>
module attributes {stable_mosaic.version = 11 : i64} {
  func.func @fc_block_kernel(%arg0: i32, %arg1: i32, %arg2: memref<16x128xf32, #tpu.memory_space<vmem>>, %arg3: memref<128x128xf32, #tpu.memory_space<vmem>>, %arg4: memref<1x128xf32, #tpu.memory_space<vmem>>, %arg5: memref<1x128xf32, #tpu.memory_space<vmem>>, %arg6: memref<16x128xf32, #tpu.memory_space<vmem>>, %arg7: memref<16x128xf32, #tpu.memory_space<vmem>>, %arg8: memref<16x128xf32, #tpu.memory_space<vmem>>) attributes {dimension_semantics = [#tpu.dimension_semantics<parallel>, #tpu.dimension_semantics<arbitrary>], iteration_bounds = array<i64: 3, 2>, scalar_prefetch = 0 : i64, scratch_operands = 1 : i64, tpu.core_type = #tpu.core_type<tc>, window_params = [{transform_indices = @transform_0, window_bounds = array<i64: 16, 128>}, {transform_indices = @transform_1, window_bounds = array<i64: 128, 128>}, {transform_indices = @transform_2, window_bounds = array<i64: 1, 128>}, {transform_indices = @transform_3, window_bounds = array<i64: 1, 128>}, {transform_indices = @transform_4, window_bounds = array<i64: 16, 128>}, {transform_indices = @transform_5, window_bounds = array<i64: 16, 128>}]} {
    %c0_i32 = arith.constant 0 : i32
    %0 = arith.cmpi eq, %arg1, %c0_i32 : i32
    %1 = arith.extui %0 : i1 to i32
    %c0_i32_0 = arith.constant 0 : i32
    %2 = arith.cmpi ne, %1, %c0_i32_0 : i32
    scf.if %2 {
      %cst_9 = arith.constant 0.000000e+00 : f32
      %12 = vector.broadcast %cst_9 : f32 to vector<16x128xf32>
      %c0_10 = arith.constant 0 : index
      %c0_11 = arith.constant 0 : index
      %13 = vector.load %arg8[%c0_10, %c0_11] : memref<16x128xf32, #tpu.memory_space<vmem>>, vector<16x128xf32>
      tpu.vector_store %arg8[%c0_10, %c0_11], %12 {strides = array<i32>} : memref<16x128xf32, #tpu.memory_space<vmem>>, vector<16x128xf32>,
    } else {
    }
    %c0 = arith.constant 0 : index
    %c0_1 = arith.constant 0 : index
    %3 = vector.load %arg8[%c0, %c0_1] : memref<16x128xf32, #tpu.memory_space<vmem>>, vector<16x128xf32>
    %c0_2 = arith.constant 0 : index
    %c0_3 = arith.constant 0 : index
    %4 = vector.load %arg2[%c0_2, %c0_3] : memref<16x128xf32, #tpu.memory_space<vmem>>, vector<16x128xf32>
    %c0_4 = arith.constant 0 : index
    %c0_5 = arith.constant 0 : index
    %5 = vector.load %arg3[%c0_4, %c0_5] : memref<128x128xf32, #tpu.memory_space<vmem>>, vector<128x128xf32>
    %cst = arith.constant dense<0.000000e+00> : vector<16x128xf32>
    %6 = tpu.matmul %4, %5, %cst {dimension_numbers = #tpu.dot_dimension_numbers<[1], [1], [0], [0], [0, 0, 1, 0], [], []>} : vector<16x128xf32>, vector<128x128xf32>, vector<16x128xf32> -> vector<16x128xf32>
    %7 = arith.addf %3, %6 : vector<16x128xf32>
    %c0_6 = arith.constant 0 : index
    %c0_7 = arith.constant 0 : index
    %8 = vector.load %arg8[%c0_6, %c0_7] : memref<16x128xf32, #tpu.memory_space<vmem>>, vector<16x128xf32>
    tpu.vector_store %arg8[%c0_6, %c0_7], %7 {strides = array<i32>} : memref<16x128xf32, #tpu.memory_space<vmem>>, vector<16x128xf32>,
    %c1_i32 = arith.constant 1 : i32
    %9 = arith.cmpi eq, %arg1, %c1_i32 : i32
    %10 = arith.extui %9 : i1 to i32
    %c0_i32_8 = arith.constant 0 : i32
    %11 = arith.cmpi ne, %10, %c0_i32_8 : i32
    scf.if %11 {
      %c0_9 = arith.constant 0 : index
      %c0_10 = arith.constant 0 : index
      %12 = vector.load %arg8[%c0_9, %c0_10] : memref<16x128xf32, #tpu.memory_space<vmem>>, vector<16x128xf32>
      %cst_11 = arith.constant dense<0.000000e+00> : vector<128xf32>
      %13 = vector.multi_reduction <add>, %12, %cst_11 [0] : vector<16x128xf32> to vector<128xf32>
      %14 = vector.shape_cast %13 : vector<128xf32> to vector<1x128xf32>
      %cst_12 = arith.constant 1.600000e+01 : f32
      %15 = vector.broadcast %cst_12 : f32 to vector<1x128xf32>
      %16 = arith.divf %14, %15 : vector<1x128xf32>
      %17 = arith.mulf %12, %12 : vector<16x128xf32>
      %cst_13 = arith.constant dense<0.000000e+00> : vector<128xf32>
      %18 = vector.multi_reduction <add>, %17, %cst_13 [0] : vector<16x128xf32> to vector<128xf32>
      %19 = vector.shape_cast %18 : vector<128xf32> to vector<1x128xf32>
      %cst_14 = arith.constant 1.600000e+01 : f32
      %20 = vector.broadcast %cst_14 : f32 to vector<1x128xf32>
      %21 = arith.divf %19, %20 : vector<1x128xf32>
      %22 = arith.mulf %16, %16 : vector<1x128xf32>
      %23 = arith.subf %21, %22 : vector<1x128xf32>
      %c0_15 = arith.constant 0 : index
      %c0_16 = arith.constant 0 : index
      %24 = vector.load %arg4[%c0_15, %c0_16] : memref<1x128xf32, #tpu.memory_space<vmem>>, vector<1x128xf32>
      %cst_17 = arith.constant 9.99999974E-6 : f32
      %25 = vector.broadcast %cst_17 : f32 to vector<1x128xf32>
      %26 = arith.addf %23, %25 : vector<1x128xf32>
      %27 = math.rsqrt %26 : vector<1x128xf32>
      %28 = arith.mulf %24, %27 : vector<1x128xf32>
      %c0_18 = arith.constant 0 : index
      %c0_19 = arith.constant 0 : index
      %29 = vector.load %arg5[%c0_18, %c0_19] : memref<1x128xf32, #tpu.memory_space<vmem>>, vector<1x128xf32>
      %30 = arith.mulf %16, %28 : vector<1x128xf32>
      %31 = arith.subf %29, %30 : vector<1x128xf32>
      %32 = vector.broadcast %28 : vector<1x128xf32> to vector<16x128xf32>
      %33 = arith.mulf %12, %32 : vector<16x128xf32>
      %34 = vector.broadcast %31 : vector<1x128xf32> to vector<16x128xf32>
      %35 = arith.addf %33, %34 : vector<16x128xf32>
      %cst_20 = arith.constant 0.000000e+00 : f32
      %36 = vector.broadcast %cst_20 : f32 to vector<16x128xf32>
      %37 = arith.maximumf %35, %36 : vector<16x128xf32>
      %c0_21 = arith.constant 0 : index
      %c0_22 = arith.constant 0 : index
      %38 = vector.load %arg6[%c0_21, %c0_22] : memref<16x128xf32, #tpu.memory_space<vmem>>, vector<16x128xf32>
      %cst_23 = arith.constant 5.000000e-01 : f32
      %39 = vector.broadcast %cst_23 : f32 to vector<16x128xf32>
      %40 = arith.cmpf olt, %38, %39 : vector<16x128xf32>
      %cst_24 = arith.constant 2.000000e+00 : f32
      %41 = vector.broadcast %cst_24 : f32 to vector<16x128xf32>
      %42 = arith.mulf %37, %41 : vector<16x128xf32>
      %cst_25 = arith.constant 0.000000e+00 : f32
      %43 = vector.broadcast %cst_25 : f32 to vector<16x128xf32>
      %44 = arith.select %40, %42, %43 : vector<16x128xi1>, vector<16x128xf32>
      %c0_26 = arith.constant 0 : index
      %c0_27 = arith.constant 0 : index
      %45 = vector.load %arg7[%c0_26, %c0_27] : memref<16x128xf32, #tpu.memory_space<vmem>>, vector<16x128xf32>
      tpu.vector_store %arg7[%c0_26, %c0_27], %44 {strides = array<i32>} : memref<16x128xf32, #tpu.memory_space<vmem>>, vector<16x128xf32>,
    } else {
    }
    return
  }
  func.func @transform_0(%arg0: i32, %arg1: i32) -> (i32, i32) {
    %c0_i32 = arith.constant 0 : i32
    %c0_i32_0 = arith.constant 0 : i32
    return %c0_i32, %arg1 : i32, i32
  }
  func.func @transform_1(%arg0: i32, %arg1: i32) -> (i32, i32) {
    %c0_i32 = arith.constant 0 : i32
    return %arg0, %arg1 : i32, i32
  }
  func.func @transform_2(%arg0: i32, %arg1: i32) -> (i32, i32) {
    %c0_i32 = arith.constant 0 : i32
    %c0_i32_0 = arith.constant 0 : i32
    return %c0_i32, %arg0 : i32, i32
  }
  func.func @transform_3(%arg0: i32, %arg1: i32) -> (i32, i32) {
    %c0_i32 = arith.constant 0 : i32
    %c0_i32_0 = arith.constant 0 : i32
    return %c0_i32, %arg0 : i32, i32
  }
  func.func @transform_4(%arg0: i32, %arg1: i32) -> (i32, i32) {
    %c0_i32 = arith.constant 0 : i32
    %c0_i32_0 = arith.constant 0 : i32
    return %c0_i32, %arg0 : i32, i32
  }
  func.func @transform_5(%arg0: i32, %arg1: i32) -> (i32, i32) {
    %c0_i32 = arith.constant 0 : i32
    %c0_i32_0 = arith.constant 0 : i32
    return %c0_i32, %arg0 : i32, i32
  }
}

</mosaic_0001>

<llo_original>
// kernel: tpu_custom_call.1
$region0: #{tpu_custom_call.1}
  #allocation0 [shape = 'u32[]', space=smem, size = 0x4, offset = 0x4, fixed_abs, tag = 'smem constant byte address 0x4 - core index']
  #allocation1 [shape = 'u32[72,128]{1,0:T(1,128)}', space=vmem, size = 0x9000, scoped, tag = 'internal scratch']
  #allocation2 [shape = 'f32[16,128]{1,0:T(8,128)}', space=vmem, size = 0x2000, scoped, tag = 'scratch operand']
  %s0 = inlined_call_operand.hbm [shape: f32[16,256], index: 0, kind: input, shape index: {}]
  %s1 = inlined_call_operand.hbm [shape: f32[384,256], index: 1, kind: input, shape index: {}]
  %s2 = inlined_call_operand.hbm [shape: f32[1,384], index: 2, kind: input, shape index: {}]
  %s3 = inlined_call_operand.hbm [shape: f32[1,384], index: 3, kind: input, shape index: {}]
  %s4 = inlined_call_operand.hbm [shape: f32[16,384], index: 4, kind: input, shape index: {}]
  %s5 = inlined_call_operand.hbm [shape: f32[16,384], index: 5, kind: output, shape index: {}]
  %s6 = sld [smem:[#allocation0]]
  $region81: #{tpu_custom_call.1} parent=0
    _
  %s8 = ssub.s32 1, %s6
  %s9 = scalar_select 0, %s8, %s6
  $region1: #{tpu_custom_call.1} parent=0
    #allocation3 [shape = 'u8[16384]{0}', space=vmem, size = 0x4000, scoped, tag = 'input window, operand 0']
    #allocation4 [shape = 's32[2]{0}', space=sflag, size = 0x8, scoped, tag = 'scoped memory for tpu_custom_call.1']
    #allocation5 [shape = 's32[2]{0}', space=sflag, size = 0x8, scoped, tag = 'scoped memory for tpu_custom_call.1']
    #allocation6 [shape = 'u8[131072]{0}', space=vmem, size = 0x20000, scoped, tag = 'input window, operand 1']
    #allocation7 [shape = 's32[2]{0}', space=sflag, size = 0x8, scoped, tag = 'scoped memory for tpu_custom_call.1']
    #allocation8 [shape = 'u8[1024]{0}', space=vmem, size = 0x400, scoped, tag = 'input window, operand 2']
    #allocation9 [shape = 'u8[1024]{0}', space=vmem, size = 0x400, scoped, tag = 'input window, operand 3']
    #allocation10 [shape = 's32[2]{0}', space=sflag, size = 0x8, scoped, tag = 'scoped memory for tpu_custom_call.1']
    #allocation11 [shape = 'u8[16384]{0}', space=vmem, size = 0x4000, scoped, tag = 'input window, operand 4']
    #allocation12 [shape = 'u8[16384]{0}', space=vmem, size = 0x4000, scoped, tag = 'output window, operand 0']
    %10 = vsyncpa [#allocation4], 0
    %s11 = scalar_lea.sflag [#allocation4], 1
    %12 = vsyncpa %s11, 0
    %13 = vsyncpa [#allocation7], 0
    %s14 = scalar_lea.sflag [#allocation7], 1
    %15 = vsyncpa %s14, 0
    %16 = vsyncpa [#allocation10], 0
    %s17 = scalar_lea.sflag [#allocation10], 1
    %18 = vsyncpa %s17, 0
    %19 = vsyncpa [#allocation5], 0
    %s20 = scalar_lea.sflag [#allocation5], 1
    %21 = vsyncpa %s20, 0
    loop: start=0, step=1, limit=8
    $region2: #{tpu_custom_call.1} parent=1 // loop_pre_header
      _
    $region3: #{tpu_custom_call.1} parent=1 // loop_header
      %s23 = sphi 0, %s27
      %p24 = scmp.ge.s32.totalorder %s23, 8
      %s30 = sphi 0, %s42
      %s31 = sphi 0, %s38
      %s32 = sphi 0, %s30
      %s33 = sphi 0, %s31
      %s34 = sphi 0, %s32
      %s35 = sphi 0, %s33
      %s45 = sphi 0, %s47
      %s48 = sphi 0, %s45
      %s49 = sphi 0, %s48
      %s65 = sphi 0, %s49
      %s73 = sphi 0, %s75
      %s76 = sphi 0, %s73
      %s77 = sphi 0, %s76
      %s93 = sphi 0, %s77
      %s99 = sphi 0, %s101
      %s102 = sphi 0, %s99
      %s103 = sphi 0, %s102
      %s119 = sphi 0, %s103
      %s125 = sphi 0, %s127
      %s128 = sphi 0, %s125
      %s129 = sphi 0, %s128
      %s145 = sphi 0, %s129
      %s151 = sphi 0, %s153
      %s154 = sphi 0, %s151
      %s155 = sphi 0, %s154
      %s171 = sphi 0, %s155
      %s177 = sphi 0, %s179
      %s180 = sphi 0, %s177
      %s181 = sphi 0, %s180
      %s197 = sphi 0, %s181
    $region4: #{tpu_custom_call.1} parent=1 // loop_header_branch
      %26 = sbr.rel (%p24) target = $region8
    $region5: #{tpu_custom_call.1} parent=1 // loop_body
      %s28 = ssub.s32 %s23, 1
      %s29 = ssub.s32 %s23, 2
      %s36 = sadd.s32 1, %s31
      %p37 = scmp.ge.s32.totalorder %s36, 2
      %s38 = scalar_select %p37, 0, %s36
      %s39 = sadd.s32 1, %s30
      %s40 = scalar_select %p37, %s39, %s30
      %p41 = scmp.ge.s32.totalorder %s40, 3
      %s42 = scalar_select %p41, 0, %s40
      %s43 = ssub.s32 %s31, %s38
      %p44 = scmp.eq.s32.totalorder %s43, 0
      %s46 = sadd.s32 %s45, 1
      %s47 = scalar_select %p44, %s45, %s46
      %p50 = pneg %p44
      %p51 = scmp.eq.s32.totalorder %s23, 5
      %p52 = por %p50, %p51
      %p53 = scmp.ne.s32.totalorder %s45, %s48
      %p54 = scmp.eq.s32.totalorder %s23, 0
      %p55 = por %p53, %p54
      %p56 = scmp.ne.s32.totalorder %s45, %s48
      %p57 = scmp.eq.s32.totalorder %s28, 5
      %p58 = por %p56, %p57
      %p59 = scmp.ne.s32.totalorder %s48, %s49
      %p60 = scmp.eq.s32.totalorder %s28, 0
      %p61 = por %p59, %p60
      %p62 = scmp.ne.s32.totalorder %s48, %s49
      %p63 = scmp.eq.s32.totalorder %s29, 5
      %p64 = por %p62, %p63
      %p66 = scmp.ne.s32.totalorder %s49, %s65
      %p67 = scmp.eq.s32.totalorder %s29, 0
      %p68 = por %p66, %p67
      %s69 = ssub.s32 %s30, %s42
      %s70 = ssub.s32 %s31, %s38
      %s71 = sor.u32 %s69, %s70
      %p72 = scmp.eq.s32.totalorder %s71, 0
      %s74 = sadd.s32 %s73, 1
      %s75 = scalar_select %p72, %s73, %s74
      %p78 = pneg %p72
      %p79 = scmp.eq.s32.totalorder %s23, 5
      %p80 = por %p78, %p79
      %p81 = scmp.ne.s32.totalorder %s73, %s76
      %p82 = scmp.eq.s32.totalorder %s23, 0
      %p83 = por %p81, %p82
      %p84 = scmp.ne.s32.totalorder %s73, %s76
      %p85 = scmp.eq.s32.totalorder %s28, 5
      %p86 = por %p84, %p85
      %p87 = scmp.ne.s32.totalorder %s76, %s77
      %p88 = scmp.eq.s32.totalorder %s28, 0
      %p89 = por %p87, %p88
      %p90 = scmp.ne.s32.totalorder %s76, %s77
      %p91 = scmp.eq.s32.totalorder %s29, 5
      %p92 = por %p90, %p91
      %p94 = scmp.ne.s32.totalorder %s77, %s93
      %p95 = scmp.eq.s32.totalorder %s29, 0
      %p96 = por %p94, %p95
      %s97 = ssub.s32 %s30, %s42
      %p98 = scmp.eq.s32.totalorder %s97, 0
      %s100 = sadd.s32 %s99, 1
      %s101 = scalar_select %p98, %s99, %s100
      %p104 = pneg %p98
      %p105 = scmp.eq.s32.totalorder %s23, 5
      %p106 = por %p104, %p105
      %p107 = scmp.ne.s32.totalorder %s99, %s102
      %p108 = scmp.eq.s32.totalorder %s23, 0
      %p109 = por %p107, %p108
      %p110 = scmp.ne.s32.totalorder %s99, %s102
      %p111 = scmp.eq.s32.totalorder %s28, 5
      %p112 = por %p110, %p111
      %p113 = scmp.ne.s32.totalorder %s102, %s103
      %p114 = scmp.eq.s32.totalorder %s28, 0
      %p115 = por %p113, %p114
      %p116 = scmp.ne.s32.totalorder %s102, %s103
      %p117 = scmp.eq.s32.totalorder %s29, 5
      %p118 = por %p116, %p117
      %p120 = scmp.ne.s32.totalorder %s103, %s119
      %p121 = scmp.eq.s32.totalorder %s29, 0
      %p122 = por %p120, %p121
      %s123 = ssub.s32 %s30, %s42
      %p124 = scmp.eq.s32.totalorder %s123, 0
      %s126 = sadd.s32 %s125, 1
      %s127 = scalar_select %p124, %s125, %s126
      %p130 = pneg %p124
      %p131 = scmp.eq.s32.totalorder %s23, 5
      %p132 = por %p130, %p131
      %p133 = scmp.ne.s32.totalorder %s125, %s128
      %p134 = scmp.eq.s32.totalorder %s23, 0
      %p135 = por %p133, %p134
      %p136 = scmp.ne.s32.totalorder %s125, %s128
      %p137 = scmp.eq.s32.totalorder %s28, 5
      %p138 = por %p136, %p137
      %p139 = scmp.ne.s32.totalorder %s128, %s129
      %p140 = scmp.eq.s32.totalorder %s28, 0
      %p141 = por %p139, %p140
      %p142 = scmp.ne.s32.totalorder %s128, %s129
      %p143 = scmp.eq.s32.totalorder %s29, 5
      %p144 = por %p142, %p143
      %p146 = scmp.ne.s32.totalorder %s129, %s145
      %p147 = scmp.eq.s32.totalorder %s29, 0
      %p148 = por %p146, %p147
      %s149 = ssub.s32 %s30, %s42
      %p150 = scmp.eq.s32.totalorder %s149, 0
      %s152 = sadd.s32 %s151, 1
      %s153 = scalar_select %p150, %s151, %s152
      %p156 = pneg %p150
      %p157 = scmp.eq.s32.totalorder %s23, 5
      %p158 = por %p156, %p157
      %p159 = scmp.ne.s32.totalorder %s151, %s154
      %p160 = scmp.eq.s32.totalorder %s23, 0
      %p161 = por %p159, %p160
      %p162 = scmp.ne.s32.totalorder %s151, %s154
      %p163 = scmp.eq.s32.totalorder %s28, 5
      %p164 = por %p162, %p163
      %p165 = scmp.ne.s32.totalorder %s154, %s155
      %p166 = scmp.eq.s32.totalorder %s28, 0
      %p167 = por %p165, %p166
      %p168 = scmp.ne.s32.totalorder %s154, %s155
      %p169 = scmp.eq.s32.totalorder %s29, 5
      %p170 = por %p168, %p169
      %p172 = scmp.ne.s32.totalorder %s155, %s171
      %p173 = scmp.eq.s32.totalorder %s29, 0
      %p174 = por %p172, %p173
      %s175 = ssub.s32 %s30, %s42
      %p176 = scmp.eq.s32.totalorder %s175, 0
      %s178 = sadd.s32 %s177, 1
      %s179 = scalar_select %p176, %s177, %s178
      %p182 = pneg %p176
      %p183 = scmp.eq.s32.totalorder %s23, 5
      %p184 = por %p182, %p183
      %p185 = scmp.ne.s32.totalorder %s177, %s180
      %p186 = scmp.eq.s32.totalorder %s23, 0
      %p187 = por %p185, %p186
      %p188 = scmp.ne.s32.totalorder %s177, %s180
      %p189 = scmp.eq.s32.totalorder %s28, 5
      %p190 = por %p188, %p189
      %p191 = scmp.ne.s32.totalorder %s180, %s181
      %p192 = scmp.eq.s32.totalorder %s28, 0
      %p193 = por %p191, %p192
      %p194 = scmp.ne.s32.totalorder %s180, %s181
      %p195 = scmp.eq.s32.totalorder %s29, 5
      %p196 = por %p194, %p195
      %p198 = scmp.ne.s32.totalorder %s181, %s197
      %p199 = scmp.eq.s32.totalorder %s29, 0
      %p200 = por %p198, %p199
      %p201 = scmp.le.s32.totalorder 1, %s23
      %p202 = scmp.lt.s32.totalorder %s23, 7
      %p203 = pnand %p201, %p202
      %p204 = pneg %p203
      // Predicated region
      $region9: #{tpu_custom_call.1} parent=5 // pred_check
        _
      $region10: #{tpu_custom_call.1} parent=5 // pred_check_branch
        %206 = sbr.rel (%p203) target = $region12
      $region11: #{tpu_custom_call.1} parent=5 // pred_region
        %s207 = ssub.s32 %s23, 1
      $region12: #{tpu_custom_call.1} parent=5 // pred_fallthru
        _
      %p208 = scmp.lt.s32.totalorder %s23, 6
      // Predicated region
      $region13: #{tpu_custom_call.1} parent=5 // pred_check
        %p209 = pneg %p208
      $region14: #{tpu_custom_call.1} parent=5 // pred_check_branch
        %211 = sbr.rel (%p209) target = $region16
      $region15: #{tpu_custom_call.1} parent=5 // pred_region
        // Predicated region
        $region17: #{tpu_custom_call.1} parent=15 // pred_check
          %p212 = pneg %p55
        $region18: #{tpu_custom_call.1} parent=15 // pred_check_branch
          %214 = sbr.rel (%p212) target = $region20
        $region19: #{tpu_custom_call.1} parent=15 // pred_region
          %s215 = sand.u32 %s45, 1
          %s216 = scalar_lea.sflag [#allocation4], %s215
          %s217 = sand.u32 %s45, 1
          %s218 = smul.addr %s217, 16
          %s219 = scalar_lea.vmem [#allocation3], %s218
          %221 = vsyncadd %s216, 0
          %s222 = smul.addr %s31, 8
          %s223 = scalar_lea.hbm %s0, %s222
          %s224 = sshll.u32 %s223, 4
          %s225 = int_to_ptr.hbm [resolvable:$true] %s224
          %s226 = sshll.u32 %s219, 4
          %s227 = int_to_ptr.vmem [resolvable:$true] %s226
          %232 = dma.hbm_to_vmem [thread:$0]  %s225, 256, %s227, %s216, 256, 128, 8
        $region20: #{tpu_custom_call.1} parent=15 // pred_fallthru
          _
        // Predicated region
        $region21: #{tpu_custom_call.1} parent=15 // pred_check
          %p233 = pneg %p83
        $region22: #{tpu_custom_call.1} parent=15 // pred_check_branch
          %235 = sbr.rel (%p233) target = $region24
        $region23: #{tpu_custom_call.1} parent=15 // pred_region
          %s236 = sand.u32 %s23, 1
          %s237 = scalar_lea.sflag [#allocation7], %s236
          %s238 = sand.u32 %s73, 1
          %s239 = smul.addr %s238, 128
          %s240 = scalar_lea.vmem [#allocation6], %s239
          %s241 = smul.u32 16, %s30
          %243 = vsyncadd %s237, 0
          %s244 = smul.addr %s241, 2
          %s245 = sadd.s32 %s31, %s244
          %s246 = smul.addr %s245, 8
          %s247 = scalar_lea.hbm %s1, %s246
          %s248 = sshll.u32 %s247, 4
          %s249 = int_to_ptr.hbm [resolvable:$true] %s248
          %s250 = sshll.u32 %s240, 4
          %s251 = int_to_ptr.vmem [resolvable:$true] %s250
          %256 = dma.hbm_to_vmem [thread:$0]  %s249, 2048, %s251, %s237, 256, 128, 8
        $region24: #{tpu_custom_call.1} parent=15 // pred_fallthru
          _
        // Predicated region
        $region25: #{tpu_custom_call.1} parent=15 // pred_check
          %p257 = pneg %p109
        $region26: #{tpu_custom_call.1} parent=15 // pred_check_branch
          %259 = sbr.rel (%p257) target = $region28
        $region27: #{tpu_custom_call.1} parent=15 // pred_region
          %s260 = sand.u32 %s23, 1
          %s261 = scalar_lea.sflag [#allocation7], %s260
          %s262 = sand.u32 %s99, 1
          %s263 = scalar_lea.vmem [#allocation8], %s262
          %265 = vsyncadd %s261, 0
          %s266 = scalar_lea.hbm %s2, %s30
          %s268 = sshll.u32 %s266, 4
          %s269 = int_to_ptr.hbm [resolvable:$true] %s268
          %s270 = sshll.u32 %s263, 4
          %s271 = int_to_ptr.vmem [resolvable:$true] %s270
          %273 = dma.hbm_to_vmem [thread:$0]  %s269, 16, %s271, %s261
        $region28: #{tpu_custom_call.1} parent=15 // pred_fallthru
          _
        // Predicated region
        $region29: #{tpu_custom_call.1} parent=15 // pred_check
          %p274 = pneg %p135
        $region30: #{tpu_custom_call.1} parent=15 // pred_check_branch
          %276 = sbr.rel (%p274) target = $region32
        $region31: #{tpu_custom_call.1} parent=15 // pred_region
          %s277 = sand.u32 %s23, 1
          %s278 = scalar_lea.sflag [#allocation10], %s277
          %s279 = sand.u32 %s125, 1
          %s280 = scalar_lea.vmem [#allocation9], %s279
          %282 = vsyncadd %s278, 0
          %s283 = scalar_lea.hbm %s3, %s30
          %s285 = sshll.u32 %s283, 4
          %s286 = int_to_ptr.hbm [resolvable:$true] %s285
          %s287 = sshll.u32 %s280, 4
          %s288 = int_to_ptr.vmem [resolvable:$true] %s287
          %290 = dma.hbm_to_vmem [thread:$0]  %s286, 16, %s288, %s278
        $region32: #{tpu_custom_call.1} parent=15 // pred_fallthru
          _
        // Predicated region
        $region33: #{tpu_custom_call.1} parent=15 // pred_check
          %p291 = pneg %p161
        $region34: #{tpu_custom_call.1} parent=15 // pred_check_branch
          %293 = sbr.rel (%p291) target = $region36
        $region35: #{tpu_custom_call.1} parent=15 // pred_region
          %s294 = sand.u32 %s23, 1
          %s295 = scalar_lea.sflag [#allocation10], %s294
          %s296 = sand.u32 %s151, 1
          %s297 = smul.addr %s296, 16
          %s298 = scalar_lea.vmem [#allocation11], %s297
          %300 = vsyncadd %s295, 0
          %s301 = smul.addr %s30, 8
          %s302 = scalar_lea.hbm %s4, %s301
          %s303 = sshll.u32 %s302, 4
          %s304 = int_to_ptr.hbm [resolvable:$true] %s303
          %s305 = sshll.u32 %s298, 4
          %s306 = int_to_ptr.vmem [resolvable:$true] %s305
          %311 = dma.hbm_to_vmem [thread:$0]  %s304, 256, %s306, %s295, 384, 128, 8
        $region36: #{tpu_custom_call.1} parent=15 // pred_fallthru
          _
      $region16: #{tpu_custom_call.1} parent=5 // pred_fallthru
        _
      %p312 = scmp.le.s32.totalorder 1, %s23
      %p313 = scmp.lt.s32.totalorder %s23, 7
      %p314 = pnand %p312, %p313
      %p315 = pneg %p314
      // Predicated region
      $region37: #{tpu_custom_call.1} parent=5 // pred_check
        _
      $region38: #{tpu_custom_call.1} parent=5 // pred_check_branch
        %317 = sbr.rel (%p314) target = $region40
      $region39: #{tpu_custom_call.1} parent=5 // pred_region
        %s318 = ssub.s32 %s23, 1
        %s319 = sand.u32 %s48, 1
        %s320 = scalar_lea.sflag [#allocation4], %s319
        %s321 = sand.u32 %s48, 1
        %s322 = smul.addr %s321, 16
        %s323 = scalar_lea.vmem [#allocation3], %s322
        // Predicated region
        $region41: #{tpu_custom_call.1} parent=39 // pred_check
          %p324 = pneg %p61
        $region42: #{tpu_custom_call.1} parent=39 // pred_check_branch
          %326 = sbr.rel (%p324) target = $region44
        $region43: #{tpu_custom_call.1} parent=39 // pred_region
          %328 = dma.done %s320, 256
        $region44: #{tpu_custom_call.1} parent=39 // pred_fallthru
          _
        %s329 = sand.u32 %s28, 1
        %s330 = scalar_lea.sflag [#allocation7], %s329
        %s331 = sand.u32 %s76, 1
        %s332 = smul.addr %s331, 128
        %s333 = scalar_lea.vmem [#allocation6], %s332
        // Predicated region
        $region45: #{tpu_custom_call.1} parent=39 // pred_check
          %p334 = pneg %p89
        $region46: #{tpu_custom_call.1} parent=39 // pred_check_branch
          %336 = sbr.rel (%p334) target = $region48
        $region47: #{tpu_custom_call.1} parent=39 // pred_region
          %338 = dma.done %s330, 2048
        $region48: #{tpu_custom_call.1} parent=39 // pred_fallthru
          _
        %s339 = sand.u32 %s28, 1
        %s340 = scalar_lea.sflag [#allocation7], %s339
        %s341 = sand.u32 %s102, 1
        %s342 = scalar_lea.vmem [#allocation8], %s341
        // Predicated region
        $region49: #{tpu_custom_call.1} parent=39 // pred_check
          %p343 = pneg %p115
        $region50: #{tpu_custom_call.1} parent=39 // pred_check_branch
          %345 = sbr.rel (%p343) target = $region52
        $region51: #{tpu_custom_call.1} parent=39 // pred_region
          %347 = dma.done %s340, 16
        $region52: #{tpu_custom_call.1} parent=39 // pred_fallthru
          _
        %s348 = sand.u32 %s28, 1
        %s349 = scalar_lea.sflag [#allocation10], %s348
        %s350 = sand.u32 %s128, 1
        %s351 = scalar_lea.vmem [#allocation9], %s350
        // Predicated region
        $region53: #{tpu_custom_call.1} parent=39 // pred_check
          %p352 = pneg %p141
        $region54: #{tpu_custom_call.1} parent=39 // pred_check_branch
          %354 = sbr.rel (%p352) target = $region56
        $region55: #{tpu_custom_call.1} parent=39 // pred_region
          %356 = dma.done %s349, 16
        $region56: #{tpu_custom_call.1} parent=39 // pred_fallthru
          _
        %s357 = sand.u32 %s28, 1
        %s358 = scalar_lea.sflag [#allocation10], %s357
        %s359 = sand.u32 %s154, 1
        %s360 = smul.addr %s359, 16
        %s361 = scalar_lea.vmem [#allocation11], %s360
        // Predicated region
        $region57: #{tpu_custom_call.1} parent=39 // pred_check
          %p362 = pneg %p167
        $region58: #{tpu_custom_call.1} parent=39 // pred_check_branch
          %364 = sbr.rel (%p362) target = $region60
        $region59: #{tpu_custom_call.1} parent=39 // pred_region
          %366 = dma.done %s358, 256
        $region60: #{tpu_custom_call.1} parent=39 // pred_fallthru
          _
        %s367 = sand.u32 %s48, 1
        %s368 = scalar_lea.sflag [#allocation4], %s367
        %s369 = sand.u32 %s48, 1
        %s370 = smul.addr %s369, 16
        %s371 = scalar_lea.vmem [#allocation3], %s370
        %p372 = pneg %p61
        %p373 = pneg %p58
        %s374 = sand.u32 %s28, 1
        %s375 = scalar_lea.sflag [#allocation7], %s374
        %s376 = sand.u32 %s76, 1
        %s377 = smul.addr %s376, 128
        %s378 = scalar_lea.vmem [#allocation6], %s377
        %p379 = pneg %p89
        %p380 = pneg %p86
        %s381 = sand.u32 %s28, 1
        %s382 = scalar_lea.sflag [#allocation7], %s381
        %s383 = sand.u32 %s102, 1
        %s384 = scalar_lea.vmem [#allocation8], %s383
        %p385 = pneg %p115
        %p386 = pneg %p112
        %s387 = sand.u32 %s28, 1
        %s388 = scalar_lea.sflag [#allocation10], %s387
        %s389 = sand.u32 %s128, 1
        %s390 = scalar_lea.vmem [#allocation9], %s389
        %p391 = pneg %p141
        %p392 = pneg %p138
        %s393 = sand.u32 %s28, 1
        %s394 = scalar_lea.sflag [#allocation10], %s393
        %s395 = sand.u32 %s154, 1
        %s396 = smul.addr %s395, 16
        %s397 = scalar_lea.vmem [#allocation11], %s396
        %p398 = pneg %p167
        %p399 = pneg %p164
        %p400 = pneg %p193
        %p401 = pneg %p190
        %s402 = sand.u32 %s180, 1
        %s403 = scalar_lea.sflag [#allocation5], %s402
        %s404 = sand.u32 %s180, 1
        %s405 = smul.addr %s404, 16
        %s406 = scalar_lea.vmem [#allocation12], %s405
        %s407 = smul.u32 16, %s32
        %p408 = scmp.eq.s32.totalorder %s33, 0
        // Predicated region
        $region61: #{tpu_custom_call.1} parent=39 // pred_check
          %p409 = pneg %p408
        $region62: #{tpu_custom_call.1} parent=39 // pred_check_branch
          %411 = sbr.rel (%p409) target = $region64
        $region63: #{tpu_custom_call.1} parent=39 // pred_region
          %412 = vst [vmem:[#allocation2] sm:$0xff] 0.0
          %413 = vst [vmem:[#allocation2 + $0x8] sm:$0xff] 0.0
        $region64: #{tpu_custom_call.1} parent=39 // pred_fallthru
          _
        %v414 = vld [vmem:[#allocation2] sm:$0xff]
        %v415 = vld [vmem:[#allocation2 + $0x8] sm:$0xff]
        %v416 = vld [vmem:[%s323] sm:$0xff]
        %v417 = vld [vmem:[%s323 + $0x8] sm:$0xff]
        %v418 = vld [vmem:[%s333] sm:$0xff]
        %v419 = vld [vmem:[%s333 + $0x8] sm:$0xff]
        %v420 = vld [vmem:[%s333 + $0x10] sm:$0xff]
        %v421 = vld [vmem:[%s333 + $0x18] sm:$0xff]
        %v422 = vld [vmem:[%s333 + $0x20] sm:$0xff]
        %v423 = vld [vmem:[%s333 + $0x28] sm:$0xff]
        %v424 = vld [vmem:[%s333 + $0x30] sm:$0xff]
        %v425 = vld [vmem:[%s333 + $0x38] sm:$0xff]
        %v426 = vld [vmem:[%s333 + $0x40] sm:$0xff]
        %v427 = vld [vmem:[%s333 + $0x48] sm:$0xff]
        %v428 = vld [vmem:[%s333 + $0x50] sm:$0xff]
        %v429 = vld [vmem:[%s333 + $0x58] sm:$0xff]
        %v430 = vld [vmem:[%s333 + $0x60] sm:$0xff]
        %v431 = vld [vmem:[%s333 + $0x68] sm:$0xff]
        %v432 = vld [vmem:[%s333 + $0x70] sm:$0xff]
        %v433 = vld [vmem:[%s333 + $0x78] sm:$0xff]
        %434 = vmatpush.xpose.msra.mxu0 %v433
        %435 = vmatpush.xpose.msra.mxu0 %v432
        %436 = vmatpush.xpose.msra.mxu0 %v431
        %437 = vmatpush.xpose.msra.mxu0 %v430
        %438 = vmatpush.xpose.msra.mxu0 %v429
        %439 = vmatpush.xpose.msra.mxu0 %v428
        %440 = vmatpush.xpose.msra.mxu0 %v427
        %441 = vmatpush.xpose.msra.mxu0 %v426
        %442 = vmatpush.xpose.msra.mxu0 %v425
        %443 = vmatpush.xpose.msra.mxu0 %v424
        %444 = vmatpush.xpose.msra.mxu0 %v423
        %445 = vmatpush.xpose.msra.mxu0 %v422
        %446 = vmatpush.xpose.msra.mxu0 %v421
        %447 = vmatpush.xpose.msra.mxu0 %v420
        %448 = vmatpush.xpose.msra.mxu0 %v419
        %449 = vmatpush.xpose.msra.mxu0 %v418
        %450 = vmatmul.f32.gmra.mxu0 %v416
        %v451 = vpop.f32.mrf.mxu0
        %v452 = vadd.f32 0.0, %v451
        %453 = vmatmul.f32.gmra.mxu0 %v417
        %v454 = vpop.f32.mrf.mxu0
        %v455 = vadd.f32 0.0, %v454
        %456 = vdwg.mxu0
        %v457 = vadd.f32 %v414, %v452
        %v458 = vadd.f32 %v415, %v455
        %459 = vst [vmem:[#allocation2] sm:$0xff] %v457
        %460 = vst [vmem:[#allocation2 + $0x8] sm:$0xff] %v458
        %p461 = scmp.eq.s32.totalorder %s33, 1
        // Predicated region
        $region65: #{tpu_custom_call.1} parent=39 // pred_check
          %p462 = pneg %p461
        $region66: #{tpu_custom_call.1} parent=39 // pred_check_branch
          %464 = sbr.rel (%p462) target = $region68
        $region67: #{tpu_custom_call.1} parent=39 // pred_region
          %v465 = vld [vmem:[#allocation2] sm:$0xff]
          %v466 = vld [vmem:[#allocation2 + $0x8] sm:$0xff]
          %v467 = vadd.f32 %v465, %v466
          %v468 = vrot.slane %v467, 4
          %v469 = vadd.f32 %v467, %v468
          %v470 = vrot.slane %v469, 2
          %v471 = vadd.f32 %v469, %v470
          %v472 = vrot.slane %v471, 1
          %v473 = vadd.f32 %v471, %v472
          %v474 = vrcp.pop 16.0
          %v475 = vmul.f32 16.0, %v474
          %v476 = vsub.f32 1.0, %v475
          %v477 = vmul.f32 %v474, %v476
          %v478 = vadd.f32 %v474, %v477
          %vm479 = vweird.f32 %v474
          %v480 = vsel %vm479, %v474, %v478
          %v481 = vmul.f32 %v473, %v480
          %v482 = vmul.f32 %v465, %v465
          %v483 = vmul.f32 %v466, %v466
          %v484 = vadd.f32 %v482, %v483
          %v485 = vrot.slane %v484, 4
          %v486 = vadd.f32 %v484, %v485
          %v487 = vrot.slane %v486, 2
          %v488 = vadd.f32 %v486, %v487
          %v489 = vrot.slane %v488, 1
          %v490 = vadd.f32 %v488, %v489
          %v491 = vmul.f32 %v490, %v480
          %v492 = vmul.f32 %v481, %v481
          %v493 = vsub.f32 %v491, %v492
          %v494 = vld [vmem:[%s342] sm:$0x1]
          %v495 = vadd.f32 %v493, 1e-05
          %v496 = vrsqrt.pop %v495
          %v497 = vmul.f32 %v496, %v495
          %v498 = vmul.f32 %v497, %v496
          %v499 = vmul.f32 0.5, %v498
          %v500 = vsub.f32 1.5, %v499
          %v501 = vmul.f32 %v496, %v500
          %vm502 = vweird.f32 %v495
          %vm503 = vweird.f32 %v496
          %vm504 = vmor %vm502, %vm503
          %v505 = vsel %vm504, %v496, %v501
          %v506 = vmul.f32 %v494, %v505
          %v507 = vld [vmem:[%s351] sm:$0x1]
          %v508 = vmul.f32 %v481, %v506
          %v509 = vsub.f32 %v507, %v508
          %v511 = vperm.slane %v506, 0
          %v513 = vmul.f32 %v465, %v511
          %v514 = vmul.f32 %v466, %v511
          %v516 = vperm.slane %v509, 0
          %v518 = vadd.f32 %v513, %v516
          %v519 = vadd.f32 %v514, %v516
          %v520 = vmax.f32 %v518, 0.0
          %v521 = vmax.f32 %v519, 0.0
          %v522 = vld [vmem:[%s361] sm:$0xff]
          %v523 = vld [vmem:[%s361 + $0x8] sm:$0xff]
          %vm524 = vcmp.lt.f32.partialorder %v522, 0.5
          %vm525 = vcmp.lt.f32.partialorder %v523, 0.5
          %v526 = vmul.f32 %v520, 2.0
          %v527 = vmul.f32 %v521, 2.0
          %v528 = vsel %vm524, %v526, 0.0
          %v529 = vsel %vm525, %v527, 0.0
          %530 = vst [vmem:[%s406] sm:$0xff] %v528
          %531 = vst [vmem:[%s406 + $0x8] sm:$0xff] %v529
        $region68: #{tpu_custom_call.1} parent=39 // pred_fallthru
          _
        %s532 = sand.u32 %s180, 1
        %s533 = scalar_lea.sflag [#allocation5], %s532
        %s534 = sand.u32 %s180, 1
        %s535 = smul.addr %s534, 16
        %s536 = scalar_lea.vmem [#allocation12], %s535
        // Predicated region
        $region69: #{tpu_custom_call.1} parent=39 // pred_check
          %p537 = pneg %p190
        $region70: #{tpu_custom_call.1} parent=39 // pred_check_branch
          %539 = sbr.rel (%p537) target = $region72
        $region71: #{tpu_custom_call.1} parent=39 // pred_region
          %541 = vsyncadd %s533, 0
          %s542 = smul.addr %s32, 8
          %s543 = scalar_lea.hbm %s5, %s542
          %s544 = sshll.u32 %s536, 4
          %s545 = int_to_ptr.vmem [resolvable:$true] %s544
          %s546 = sshll.u32 %s543, 4
          %s547 = int_to_ptr.hbm [resolvable:$true] %s546
          %552 = dma.vmem_to_hbm [thread:$0]  %s545, 256, %s547, %s533, 128, 384, 8
        $region72: #{tpu_custom_call.1} parent=39 // pred_fallthru
          _
      $region40: #{tpu_custom_call.1} parent=5 // pred_fallthru
        _
      %p553 = scmp.le.s32.totalorder 2, %s23
      // Predicated region
      $region73: #{tpu_custom_call.1} parent=5 // pred_check
        %p554 = pneg %p553
      $region74: #{tpu_custom_call.1} parent=5 // pred_check_branch
        %556 = sbr.rel (%p554) target = $region76
      $region75: #{tpu_custom_call.1} parent=5 // pred_region
        %s557 = ssub.s32 %s23, 2
        // Predicated region
        $region77: #{tpu_custom_call.1} parent=75 // pred_check
          %p558 = pneg %p196
        $region78: #{tpu_custom_call.1} parent=75 // pred_check_branch
          %560 = sbr.rel (%p558) target = $region80
        $region79: #{tpu_custom_call.1} parent=75 // pred_region
          %s561 = sand.u32 %s181, 1
          %s562 = scalar_lea.sflag [#allocation5], %s561
          %s563 = sand.u32 %s181, 1
          %s564 = smul.addr %s563, 16
          %s565 = scalar_lea.vmem [#allocation12], %s564
          %567 = dma.done %s562, 256
        $region80: #{tpu_custom_call.1} parent=75 // pred_fallthru
          _
      $region76: #{tpu_custom_call.1} parent=5 // pred_fallthru
        _
    $region6: #{tpu_custom_call.1} parent=1 // loop_footer
      %s27 = sadd.s32 1, %s23
    $region7: #{tpu_custom_call.1} parent=1 // loop_footer_branch
      %22 = sbr.rel target = $region3
    $region8: #{tpu_custom_call.1} parent=1 // loop_exit
      _
    %568 = vsyncpa [#allocation4], 1
    %s569 = scalar_lea.sflag [#allocation4], 1
    %570 = vsyncpa %s569, 1
    %571 = vsyncpa [#allocation7], 1
    %s572 = scalar_lea.sflag [#allocation7], 1
    %573 = vsyncpa %s572, 1
    %574 = vsyncpa [#allocation10], 1
    %s575 = scalar_lea.sflag [#allocation10], 1
    %576 = vsyncpa %s575, 1
    %577 = vsyncpa [#allocation5], 1
    %s578 = scalar_lea.sflag [#allocation5], 1
    %579 = vsyncpa %s578, 1

</llo_original>
